<compile_context>
chip_gen: v5e
topology: v5e:2x2
jax: 0.10.0
libtpu: 0.0.40
codegen_flags: <defaults>
</compile_context>

<pallas_src>
import functools

import jax
import jax.numpy as jnp
from jax.experimental import pallas as pl
from jax.experimental.pallas import tpu as pltpu

BN_EPS = 1e-5
LANE = 128
MAX_TILE_M = 2048


def _round_up(x, m):
    return (x + m - 1) // m * m


def _pow2_floor(x):
    return 1 << (max(int(x), 1).bit_length() - 1)


def _pow2_ceil(x):
    return 1 << max(int(x) - 1, 0).bit_length()


def _pad2(a, rows, cols):
    r, c = a.shape
    return jnp.pad(a, ((0, rows - r), (0, cols - c)))


@functools.lru_cache(maxsize=None)
def _vmem_limit_bytes():
    """Generation-aware scoped-VMEM limit: ~70% of physical VMEM (64 MiB on v7x,
    128 MiB on v5e/v6e), capped at 100 MiB; conservative fallback if the query fails."""
    phys = 64 << 20
    try:
        info = pltpu.get_tpu_info()
        phys = int(getattr(info, "vmem_capacity_bytes", phys))
    except Exception:
        pass
    return int(min(phys * 0.70, 100 << 20))


def _pick_tile_m(k_pad, c_tot, *, out_bytes, has_identity):
    """Largest power-of-2 multiple of 128 rows whose double-buffered working set fits the
    generation-aware VMEM budget, accounting for the single-buffered resident weight."""
    budget = _vmem_limit_bytes() - (2 << 20)               # headroom for mosaic scratch
    per_row_p1 = 2 * (2 * k_pad) + 2 * (2 * c_tot)         # bf16 patches + bf16 y, x2 buffers
    per_row_p2 = (2 * (2 * c_tot)                           # bf16 y in, x2 buffers
                  + (2 * (2 * c_tot) if has_identity else 0)
                  + 2 * (out_bytes * c_tot))                # out, x2 buffers
    per_row = max(per_row_p1, per_row_p2)
    resident = 2 * k_pad * c_tot + 64 * c_tot               # bf16 weight (Buffered(1)) + stats/gamma/beta
    avail = max(budget - resident, per_row * LANE)
    units = max(avail // (per_row * LANE), 1)               # multiples of 128 rows
    return int(min(LANE * _pow2_floor(units), MAX_TILE_M))


# ----------------------------------------------------------------------------
# Pass 1: tiled matmul (MXU, bf16 in / f32 accumulate) + per-tile partial stats.
# Each grid step writes its own (1, 2, C) partial-sum block -> no resident accumulator,
# so the grid axis can be "parallel" (megacore-shardable on v7x).
# ----------------------------------------------------------------------------
def _matmul_stats_kernel(p_ref, w_ref, y_ref, stats_ref):
    acc = jnp.dot(p_ref[...], w_ref[...], preferred_element_type=jnp.float32)
    y_ref[...] = acc.astype(y_ref.dtype)                    # bf16 intermediate to HBM
    s = jnp.sum(acc, axis=0, keepdims=True)                  # (1, C) per-channel sum (f32)
    ss = jnp.sum(acc * acc, axis=0, keepdims=True)           # (1, C) per-channel sum of squares
    stats_ref[...] = jnp.concatenate([s, ss], axis=0)[None]  # (1, 2, C) partials for this tile


# ----------------------------------------------------------------------------
# Pass 2: tiled BN normalize (+ optional residual add) (+ full or partial-lane ReLU).
# ----------------------------------------------------------------------------
def _bn_norm_kernel(y_ref, stats_ref, gamma_ref, beta_ref, *rest,
                    inv_m, relu_cols, has_identity):
    if has_identity:
        ident_ref, out_ref = rest
    else:
        (out_ref,) = rest

    mean = stats_ref[0:1, :] * inv_m
    var = jnp.maximum(stats_ref[1:2, :] * inv_m - mean * mean, 0.0)
    inv_std = jax.lax.rsqrt(var + BN_EPS)
    scale = gamma_ref[...] * inv_std
    shift = beta_ref[...] - mean * scale

    y = y_ref[...].astype(jnp.float32) * scale + shift
    if has_identity:
        y = y + ident_ref[...].astype(jnp.float32)
    if relu_cols is not None:
        if relu_cols >= y.shape[1]:
            y = jnp.maximum(y, 0.0)
        else:
            # ReLU only the conv output lanes; fused identity lanes stay linear.
            lane = jax.lax.broadcasted_iota(jnp.int32, y.shape, 1)
            y = jnp.where(lane < relu_cols, jnp.maximum(y, 0.0), y)
    out_ref[...] = y.astype(out_ref.dtype)


# ----------------------------------------------------------------------------
# Wrapper: two-pass fused conv(as matmul) -> BN(train stats) -> [+identity] -> ReLU
# ----------------------------------------------------------------------------
def conv_bn_pallas(patches, w_mat, gamma, beta, m_real, *, tile_m,
                   identity=None, identity_col_block=0, relu_cols=None,
                   out_dtype=jnp.float32):
    """patches: (M_pad, K_pad) bf16; w_mat: (K_pad, C) bf16; gamma/beta: (1, C) f32.
    BN uses training-mode batch statistics over the first `m_real` rows; padded rows are
    exactly-zero matmul rows (zero patches x finite weights), so they don't perturb the
    sums. `identity` (optional, bf16, (M_pad, k*C)) contributes its channel block
    `identity_col_block` (width C) before the ReLU."""
    m_pad, k_pad = patches.shape
    c_tot = w_mat.shape[1]
    n_tiles = m_pad // tile_m
    vmem_limit = _vmem_limit_bytes()

    # ---- pass 1: MXU matmul + per-tile partial stats ("parallel" -> megacore) ----------
    y, part = pl.pallas_call(
        _matmul_stats_kernel,
        grid=(n_tiles,),
        in_specs=[
            pl.BlockSpec((tile_m, k_pad), lambda i: (i, 0)),
            pl.BlockSpec((k_pad, c_tot), lambda i: (0, 0),
                         pipeline_mode=pl.Buffered(1)),      # resident weight, single buffer
        ],
        out_specs=(
            pl.BlockSpec((tile_m, c_tot), lambda i: (i, 0)),
            pl.BlockSpec((1, 2, c_tot), lambda i: (i, 0, 0)),
        ),
        out_shape=(
            jax.ShapeDtypeStruct((m_pad, c_tot), jnp.bfloat16),
            jax.ShapeDtypeStruct((n_tiles, 2, c_tot), jnp.float32),
        ),
        compiler_params=pltpu.CompilerParams(
            dimension_semantics=("parallel",), vmem_limit_bytes=vmem_limit),
        cost_estimate=pl.CostEstimate(
            flops=2 * m_pad * k_pad * c_tot,
            transcendentals=0,
            bytes_accessed=(m_pad * k_pad * 2 + k_pad * c_tot * 2
                            + m_pad * c_tot * 2 + n_tiles * 2 * c_tot * 4)),
    )(patches, w_mat)

    stats = jnp.sum(part, axis=0)                             # (2, C) tiny JAX-side reduce

    # ---- pass 2: BN normalize (+ residual add) (+ ReLU), fully parallel ----------------
    kern = functools.partial(
        _bn_norm_kernel, inv_m=1.0 / float(m_real), relu_cols=relu_cols,
        has_identity=identity is not None)
    in_specs = [
        pl.BlockSpec((tile_m, c_tot), lambda i: (i, 0)),
        pl.BlockSpec((2, c_tot), lambda i: (0, 0)),
        pl.BlockSpec((1, c_tot), lambda i: (0, 0)),
        pl.BlockSpec((1, c_tot), lambda i: (0, 0)),
    ]
    args = [y, stats, gamma, beta]
    ident_bytes = 0
    if identity is not None:
        in_specs.append(
            pl.BlockSpec((tile_m, c_tot), lambda i, b=identity_col_block: (i, b)))
        args.append(identity)
        ident_bytes = m_pad * c_tot * identity.dtype.itemsize
    out_bytes = jnp.dtype(out_dtype).itemsize

    return pl.pallas_call(
        kern,
        grid=(n_tiles,),
        in_specs=in_specs,
        out_specs=pl.BlockSpec((tile_m, c_tot), lambda i: (i, 0)),
        out_shape=jax.ShapeDtypeStruct((m_pad, c_tot), out_dtype),
        compiler_params=pltpu.CompilerParams(
            dimension_semantics=("parallel",), vmem_limit_bytes=vmem_limit),
        cost_estimate=pl.CostEstimate(
            flops=6 * m_pad * c_tot,
            transcendentals=n_tiles * c_tot,
            bytes_accessed=(m_pad * c_tot * 2 + ident_bytes
                            + m_pad * c_tot * out_bytes + 4 * c_tot * 4)),
    )(*args)


# ----------------------------------------------------------------------------
# Glue: im2col + weight reshaping (plain JAX, bf16 activations)
# ----------------------------------------------------------------------------
def im2col(x_nhwc, kh, kw, stride, pad):
    n, h, w, c = x_nhwc.shape
    xp = jnp.pad(x_nhwc, ((0, 0), (pad, pad), (pad, pad), (0, 0)))
    ho = (h + 2 * pad - kh) // stride + 1
    wo = (w + 2 * pad - kw) // stride + 1
    cols = []
    for i in range(kh):
        for j in range(kw):
            cols.append(xp[:, i:i + stride * ho:stride, j:j + stride * wo:stride, :])
    patches = jnp.concatenate(cols, axis=-1)                  # (N, Ho, Wo, kh*kw*C)
    return patches.reshape(n * ho * wo, kh * kw * c), ho, wo


def conv_w_to_mat(w_oihw):
    """PyTorch (Cout, Cin, kh, kw) -> (kh*kw*Cin, Cout), matching im2col tap order."""
    cout, cin, kh, kw = w_oihw.shape
    return jnp.transpose(w_oihw, (2, 3, 1, 0)).reshape(kh * kw * cin, cout)


# ----------------------------------------------------------------------------
# BasicBlockGeo forward (Pallas-backed)
# ----------------------------------------------------------------------------
def basic_block_geo_forward(x, g1, g2, params, stride):
    """x: (N, Cin, H, W); g1: (N, G, H, W) or None; g2: (N, G, Ho, Wo) or None."""
    n, inplanes = x.shape[0], x.shape[1]
    planes = params["w1"].shape[0]
    c_pad = _round_up(planes, LANE)
    has_ds = params.get("wd") is not None
    # Narrow layers: pack the fused 1x1-downsample output channels into the padding lanes
    # of the same 128-wide block instead of spending a second lane block on them.
    packed_ds = has_ds and 2 * planes <= c_pad

    x_nhwc = jnp.transpose(x, (0, 2, 3, 1))
    xcat_nhwc = x_nhwc
    if g1 is not None:
        xcat_nhwc = jnp.concatenate(
            [x_nhwc, jnp.transpose(g1, (0, 2, 3, 1))], axis=-1)
    c1 = xcat_nhwc.shape[-1]

    # ---- conv1 (3x3, stride) [+ fused 1x1 downsample] + bn + relu ------------
    p1, ho, wo = im2col(xcat_nhwc.astype(jnp.bfloat16), 3, 3, stride, 1)
    m = n * ho * wo
    k1 = p1.shape[1]
    k1_pad = _round_up(k1, LANE)

    c_tot1 = c_pad if (packed_ds or not has_ds) else 2 * c_pad
    ds_off = planes if packed_ds else c_pad                   # lane offset of the fused ds block

    # conv2 geometry is needed up-front so both convs pick their own tile but share one M pad.
    c2 = planes + (g2.shape[1] if g2 is not None else 0)
    k2_pad = _round_up(9 * c2, LANE)

    tile1 = _pick_tile_m(k1_pad, c_tot1, out_bytes=2, has_identity=False)
    tile2 = _pick_tile_m(k2_pad, c_pad, out_bytes=4, has_identity=True)
    cap = LANE * _pow2_ceil(-(-m // LANE))                    # don't over-pad tiny problems
    tile1, tile2 = min(tile1, cap), min(tile2, cap)
    m_pad = _round_up(m, max(tile1, tile2))                   # both pow2*128 tiles divide it

    p1_pad = _pad2(p1, m_pad, k1_pad)

    w1_mat = conv_w_to_mat(params["w1"]).astype(jnp.bfloat16)            # (k1, planes)
    w_f = jnp.zeros((k1_pad, c_tot1), jnp.bfloat16).at[:k1, :planes].set(w1_mat)
    gamma_f = jnp.zeros((1, c_tot1), jnp.float32).at[0, :planes].set(
        params["gamma1"].reshape(-1))
    beta_f = jnp.zeros((1, c_tot1), jnp.float32).at[0, :planes].set(
        params["beta1"].reshape(-1))
    if has_ds:
        # 1x1 stride-s conv == centre tap of the 3x3 stride-s patches -> fuse its columns.
        wd_mat = jnp.transpose(params["wd"][:, :, 0, 0], (1, 0)).astype(jnp.bfloat16)
        center = 4 * c1                                       # tap (i=1, j=1) in (i, j, cin) order
        w_f = w_f.at[center:center + c1, ds_off:ds_off + planes].set(wd_mat)
        gamma_f = gamma_f.at[0, ds_off:ds_off + planes].set(params["gammad"].reshape(-1))
        beta_f = beta_f.at[0, ds_off:ds_off + planes].set(params["betad"].reshape(-1))

    # ReLU only the conv1 output lanes; fused identity lanes stay linear.
    relu1 = planes if has_ds else c_tot1
    y1 = conv_bn_pallas(p1_pad, w_f, gamma_f, beta_f, m_real=m, tile_m=tile1,
                        relu_cols=relu1, out_dtype=jnp.bfloat16)

    out1_nhwc = y1[:m, :planes].reshape(n, ho, wo, planes)    # bf16, feeds conv2's im2col

    # ---- identity branch ------------------------------------------------------
    if has_ds:
        identity = y1
        if packed_ds:
            identity_block = 0
            out2_off = planes     # conv2's output lanes aligned with packed identity lanes
        else:
            identity_block = 1    # identity lives in the second 128-lane block of y1
            out2_off = 0
    else:
        # PyTorch invariant: no downsample => stride == 1 and inplanes == planes.
        assert stride == 1 and inplanes == planes, \
            "downsample weights required when stride != 1 or inplanes != planes"
        identity = _pad2(x_nhwc.reshape(m, planes).astype(jnp.bfloat16), m_pad, c_pad)
        identity_block = 0
        out2_off = 0

    # ---- conv2 (3x3, stride 1) + bn + residual add + relu ----------------------
    out_cat = out1_nhwc
    if g2 is not None:
        out_cat = jnp.concatenate(
            [jnp.transpose(g2, (0, 2, 3, 1)).astype(jnp.bfloat16), out_cat], axis=-1)
    p2, _, _ = im2col(out_cat, 3, 3, 1, 1)
    p2_pad = _pad2(p2, m_pad, k2_pad)

    # conv2's output channels are emitted at lane offset `out2_off` so the residual add
    # lines up with wherever the identity lanes live (no in-kernel lane shift needed).
    w2_mat = conv_w_to_mat(params["w2"]).astype(jnp.bfloat16)            # (9*c2, planes)
    w2_f = jnp.zeros((k2_pad, c_pad), jnp.bfloat16).at[
        :9 * c2, out2_off:out2_off + planes].set(w2_mat)
    gamma2 = jnp.zeros((1, c_pad), jnp.float32).at[0, out2_off:out2_off + planes].set(
        params["gamma2"].reshape(-1))
    beta2 = jnp.zeros((1, c_pad), jnp.float32).at[0, out2_off:out2_off + planes].set(
        params["beta2"].reshape(-1))

    out2 = conv_bn_pallas(p2_pad, w2_f, gamma2, beta2, m_real=m, tile_m=tile2,
                          identity=identity, identity_col_block=identity_block,
                          relu_cols=c_pad, out_dtype=jnp.float32)

    out = out2[:m, out2_off:out2_off + planes].reshape(n, ho, wo, planes)
    return jnp.transpose(out, (0, 3, 1, 2))


# ----------------------------------------------------------------------------
# Pure-JAX reference (f32, for correctness check)
# ----------------------------------------------------------------------------
def _ref_forward(x, g1, g2, params, stride):
    def conv(z, w, s, pad):
        return jax.lax.conv_general_dilated(
            z, w, (s, s), [(pad, pad), (pad, pad)],
            dimension_numbers=("NCHW", "OIHW", "NCHW"))

    def bn(y, gamma, beta):
        mean = y.mean(axis=(0, 2, 3), keepdims=True)
        var = y.var(axis=(0, 2, 3), keepdims=True)  # biased, training mode
        return ((y - mean) / jnp.sqrt(var + BN_EPS)
                * gamma.reshape(1, -1, 1, 1) + beta.reshape(1, -1, 1, 1))

    xc = jnp.concatenate([x, g1], axis=1) if g1 is not None else x
    out = jax.nn.relu(bn(conv(xc, params["w1"], stride, 1),
                         params["gamma1"], params["beta1"]))
    if g2 is not None:
        out = jnp.concatenate([g2, out], axis=1)
    out = bn(conv(out, params["w2"], 1, 1), params["gamma2"], params["beta2"])
    if params.get("wd") is not None:
        identity = bn(conv(xc, params["wd"], stride, 0),
                      params["gammad"], params["betad"])
    else:
        identity = x
    return jax.nn.relu(out + identity)


# ----------------------------------------------------------------------------
if __name__ == "__main__":
    key = jax.random.PRNGKey(0)
    ks = jax.random.split(key, 12)

    N, inplanes, planes, geoplanes = 2, 4, 8, 2
    H = W = 16
    stride = 2
    Ho, Wo = H // stride, W // stride

    x = jax.random.normal(ks[0], (N, inplanes, H, W), jnp.float32)
    g1 = jax.random.normal(ks[1], (N, geoplanes, H, W), jnp.float32)
    g2 = jax.random.normal(ks[2], (N, geoplanes, Ho, Wo), jnp.float32)

    params = {
        "w1": 0.1 * jax.random.normal(ks[3], (planes, inplanes + geoplanes, 3, 3), jnp.float32),
        "gamma1": (1.0 + 0.1 * jax.random.normal(ks[4], (1, planes), jnp.float32)),
        "beta1": 0.1 * jax.random.normal(ks[5], (1, planes), jnp.float32),
        "w2": 0.1 * jax.random.normal(ks[6], (planes, planes + geoplanes, 3, 3), jnp.float32),
        "gamma2": (1.0 + 0.1 * jax.random.normal(ks[7], (1, planes), jnp.float32)),
        "beta2": 0.1 * jax.random.normal(ks[8], (1, planes), jnp.float32),
        # downsample exists because stride != 1 (and inplanes != planes)
        "wd": 0.1 * jax.random.normal(ks[9], (planes, inplanes + geoplanes, 1, 1), jnp.float32),
        "gammad": (1.0 + 0.1 * jax.random.normal(ks[10], (1, planes), jnp.float32)),
        "betad": 0.1 * jax.random.normal(ks[11], (1, planes), jnp.float32),
    }

    fwd = jax.jit(functools.partial(basic_block_geo_forward, stride=stride))
    out = jax.block_until_ready(fwd(x, g1, g2, params))
    assert out.shape == (N, planes, Ho, Wo), out.shape

    ref = jax.block_until_ready(_ref_forward(x, g1, g2, params, stride))
    err = float(jnp.max(jnp.abs(out - ref)))
    # bf16 MXU inputs + bf16 intermediates (f32 accumulate / f32 BN statistics):
    # tolerance loosened vs the pure-f32 reference.
    assert jnp.allclose(out, ref, atol=8e-2, rtol=8e-2), f"max abs err {err}"

    print("KERNEL_OK")
</pallas_src>

<mosaic_0001>
module attributes {stable_mosaic.version = 11 : i64} {
  func.func @_matmul_stats_kernel(%arg0: i32, %arg1: memref<128x128xbf16, #tpu.memory_space<vmem>>, %arg2: memref<128x128xbf16, #tpu.memory_space<vmem>>, %arg3: memref<128x128xbf16, #tpu.memory_space<vmem>>, %arg4: memref<1x2x128xf32, #tpu.memory_space<vmem>>) attributes {dimension_semantics = [#tpu.dimension_semantics<parallel>], iteration_bounds = array<i64: 1>, scalar_prefetch = 0 : i64, scratch_operands = 0 : i64, tpu.core_type = #tpu.core_type<tc>, window_params = [{transform_indices = @transform_0, window_bounds = array<i64: 128, 128>}, {pipeline_mode = #tpu.pipeline_mode<synchronous>, transform_indices = @transform_1, window_bounds = array<i64: 128, 128>}, {transform_indices = @transform_2, window_bounds = array<i64: 128, 128>}, {transform_indices = @transform_3, window_bounds = array<i64: 1, 2, 128>}]} {
    %c0 = arith.constant 0 : index
    %c0_0 = arith.constant 0 : index
    %0 = vector.load %arg1[%c0, %c0_0] : memref<128x128xbf16, #tpu.memory_space<vmem>>, vector<128x128xbf16>
    %c0_1 = arith.constant 0 : index
    %c0_2 = arith.constant 0 : index
    %1 = vector.load %arg2[%c0_1, %c0_2] : memref<128x128xbf16, #tpu.memory_space<vmem>>, vector<128x128xbf16>
    %cst = arith.constant dense<0.000000e+00> : vector<128x128xf32>
    %2 = tpu.matmul %0, %1, %cst {dimension_numbers = #tpu.dot_dimension_numbers<[1], [0], [0], [1], [0, 0, 1, 1], [], []>} : vector<128x128xbf16>, vector<128x128xbf16>, vector<128x128xf32> -> vector<128x128xf32>
    %3 = arith.truncf %2 : vector<128x128xf32> to vector<128x128xbf16>
    %c0_3 = arith.constant 0 : index
    %c0_4 = arith.constant 0 : index
    %4 = vector.load %arg3[%c0_3, %c0_4] : memref<128x128xbf16, #tpu.memory_space<vmem>>, vector<128x128xbf16>
    tpu.vector_store %arg3[%c0_3, %c0_4], %3 {strides = array<i32>} : memref<128x128xbf16, #tpu.memory_space<vmem>>, vector<128x128xbf16>,
    %cst_5 = arith.constant dense<0.000000e+00> : vector<128xf32>
    %5 = vector.multi_reduction <add>, %2, %cst_5 [0] : vector<128x128xf32> to vector<128xf32>
    %6 = vector.shape_cast %5 : vector<128xf32> to vector<1x128xf32>
    %7 = arith.mulf %2, %2 : vector<128x128xf32>
    %cst_6 = arith.constant dense<0.000000e+00> : vector<128xf32>
    %8 = vector.multi_reduction <add>, %7, %cst_6 [0] : vector<128x128xf32> to vector<128xf32>
    %9 = vector.shape_cast %8 : vector<128xf32> to vector<1x128xf32>
    %10 = tpu.concatenate %6, %9 in 0 : vector<1x128xf32>, vector<1x128xf32> -> vector<2x128xf32>
    %11 = vector.shape_cast %10 : vector<2x128xf32> to vector<1x2x128xf32>
    %c0_7 = arith.constant 0 : index
    %c0_8 = arith.constant 0 : index
    %c0_9 = arith.constant 0 : index
    %12 = vector.load %arg4[%c0_7, %c0_8, %c0_9] : memref<1x2x128xf32, #tpu.memory_space<vmem>>, vector<1x2x128xf32>
    tpu.vector_store %arg4[%c0_7, %c0_8, %c0_9], %11 {strides = array<i32>} : memref<1x2x128xf32, #tpu.memory_space<vmem>>, vector<1x2x128xf32>,
    return
  }
  func.func @transform_0(%arg0: i32) -> (i32, i32) {
    %c0_i32 = arith.constant 0 : i32
    %c0_i32_0 = arith.constant 0 : i32
    return %arg0, %c0_i32 : i32, i32
  }
  func.func @transform_1(%arg0: i32) -> (i32, i32) {
    %c0_i32 = arith.constant 0 : i32
    %c0_i32_0 = arith.constant 0 : i32
    %c0_i32_1 = arith.constant 0 : i32
    return %c0_i32, %c0_i32_0 : i32, i32
  }
  func.func @transform_2(%arg0: i32) -> (i32, i32) {
    %c0_i32 = arith.constant 0 : i32
    %c0_i32_0 = arith.constant 0 : i32
    return %arg0, %c0_i32 : i32, i32
  }
  func.func @transform_3(%arg0: i32) -> (i32, i32, i32) {
    %c0_i32 = arith.constant 0 : i32
    %c0_i32_0 = arith.constant 0 : i32
    %c0_i32_1 = arith.constant 0 : i32
    return %arg0, %c0_i32, %c0_i32_0 : i32, i32, i32
  }
}

module attributes {stable_mosaic.version = 11 : i64} {
  func.func @_bn_norm_kernel(%arg0: i32, %arg1: memref<128x128xbf16, #tpu.memory_space<vmem>>, %arg2: memref<2x128xf32, #tpu.memory_space<vmem>>, %arg3: memref<1x128xf32, #tpu.memory_space<vmem>>, %arg4: memref<1x128xf32, #tpu.memory_space<vmem>>, %arg5: memref<128x128xbf16, #tpu.memory_space<vmem>>) attributes {dimension_semantics = [#tpu.dimension_semantics<parallel>], iteration_bounds = array<i64: 1>, scalar_prefetch = 0 : i64, scratch_operands = 0 : i64, tpu.core_type = #tpu.core_type<tc>, window_params = [{transform_indices = @transform_0, window_bounds = array<i64: 128, 128>}, {pipeline_mode = #tpu.pipeline_mode<synchronous>, transform_indices = @transform_1, window_bounds = array<i64: 2, 128>}, {pipeline_mode = #tpu.pipeline_mode<synchronous>, transform_indices = @transform_2, window_bounds = array<i64: 1, 128>}, {pipeline_mode = #tpu.pipeline_mode<synchronous>, transform_indices = @transform_3, window_bounds = array<i64: 1, 128>}, {transform_indices = @transform_4, window_bounds = array<i64: 128, 128>}]} {
    %c0 = arith.constant 0 : index
    %c0_0 = arith.constant 0 : index
    %0 = vector.load %arg2[%c0, %c0_0] : memref<2x128xf32, #tpu.memory_space<vmem>>, vector<1x128xf32>
    %cst = arith.constant 7.812500e-03 : f32
    %1 = vector.broadcast %cst : f32 to vector<1x128xf32>
    %2 = arith.mulf %0, %1 : vector<1x128xf32>
    %c1 = arith.constant 1 : index
    %c0_1 = arith.constant 0 : index
    %3 = vector.load %arg2[%c1, %c0_1] : memref<2x128xf32, #tpu.memory_space<vmem>>, vector<1x128xf32>
    %cst_2 = arith.constant 7.812500e-03 : f32
    %4 = vector.broadcast %cst_2 : f32 to vector<1x128xf32>
    %5 = arith.mulf %3, %4 : vector<1x128xf32>
    %6 = arith.mulf %2, %2 : vector<1x128xf32>
    %7 = arith.subf %5, %6 : vector<1x128xf32>
    %cst_3 = arith.constant 0.000000e+00 : f32
    %8 = vector.broadcast %cst_3 : f32 to vector<1x128xf32>
    %9 = arith.maximumf %7, %8 : vector<1x128xf32>
    %cst_4 = arith.constant 9.99999974E-6 : f32
    %10 = vector.broadcast %cst_4 : f32 to vector<1x128xf32>
    %11 = arith.addf %9, %10 : vector<1x128xf32>
    %12 = math.rsqrt %11 : vector<1x128xf32>
    %c0_5 = arith.constant 0 : index
    %c0_6 = arith.constant 0 : index
    %13 = vector.load %arg3[%c0_5, %c0_6] : memref<1x128xf32, #tpu.memory_space<vmem>>, vector<1x128xf32>
    %14 = arith.mulf %13, %12 : vector<1x128xf32>
    %c0_7 = arith.constant 0 : index
    %c0_8 = arith.constant 0 : index
    %15 = vector.load %arg4[%c0_7, %c0_8] : memref<1x128xf32, #tpu.memory_space<vmem>>, vector<1x128xf32>
    %16 = arith.mulf %2, %14 : vector<1x128xf32>
    %17 = arith.subf %15, %16 : vector<1x128xf32>
    %c0_9 = arith.constant 0 : index
    %c0_10 = arith.constant 0 : index
    %18 = vector.load %arg1[%c0_9, %c0_10] : memref<128x128xbf16, #tpu.memory_space<vmem>>, vector<128x128xbf16>
    %19 = arith.extf %18 : vector<128x128xbf16> to vector<128x128xf32>
    %20 = vector.broadcast %14 : vector<1x128xf32> to vector<128x128xf32>
    %21 = arith.mulf %19, %20 : vector<128x128xf32>
    %22 = vector.broadcast %17 : vector<1x128xf32> to vector<128x128xf32>
    %23 = arith.addf %21, %22 : vector<128x128xf32>
    %24 = tpu.iota {dimensions = array<i32: 1>} : vector<128x128xi32>
    %c8_i32 = arith.constant 8 : i32
    %25 = vector.broadcast %c8_i32 : i32 to vector<128x128xi32>
    %26 = arith.cmpi slt, %24, %25 : vector<128x128xi32>
    %cst_11 = arith.constant 0.000000e+00 : f32
    %27 = vector.broadcast %cst_11 : f32 to vector<128x128xf32>
    %28 = arith.maximumf %23, %27 : vector<128x128xf32>
    %29 = arith.select %26, %28, %23 : vector<128x128xi1>, vector<128x128xf32>
    %30 = arith.truncf %29 : vector<128x128xf32> to vector<128x128xbf16>
    %c0_12 = arith.constant 0 : index
    %c0_13 = arith.constant 0 : index
    %31 = vector.load %arg5[%c0_12, %c0_13] : memref<128x128xbf16, #tpu.memory_space<vmem>>, vector<128x128xbf16>
    tpu.vector_store %arg5[%c0_12, %c0_13], %30 {strides = array<i32>} : memref<128x128xbf16, #tpu.memory_space<vmem>>, vector<128x128xbf16>,
    return
  }
  func.func @transform_0(%arg0: i32) -> (i32, i32) {
    %c0_i32 = arith.constant 0 : i32
    %c0_i32_0 = arith.constant 0 : i32
    return %arg0, %c0_i32 : i32, i32
  }
  func.func @transform_1(%arg0: i32) -> (i32, i32) {
    %c0_i32 = arith.constant 0 : i32
    %c0_i32_0 = arith.constant 0 : i32
    %c0_i32_1 = arith.constant 0 : i32
    return %c0_i32, %c0_i32_0 : i32, i32
  }
  func.func @transform_2(%arg0: i32) -> (i32, i32) {
    %c0_i32 = arith.constant 0 : i32
    %c0_i32_0 = arith.constant 0 : i32
    %c0_i32_1 = arith.constant 0 : i32
    return %c0_i32, %c0_i32_0 : i32, i32
  }
  func.func @transform_3(%arg0: i32) -> (i32, i32) {
    %c0_i32 = arith.constant 0 : i32
    %c0_i32_0 = arith.constant 0 : i32
    %c0_i32_1 = arith.constant 0 : i32
    return %c0_i32, %c0_i32_0 : i32, i32
  }
  func.func @transform_4(%arg0: i32) -> (i32, i32) {
    %c0_i32 = arith.constant 0 : i32
    %c0_i32_0 = arith.constant 0 : i32
    return %arg0, %c0_i32 : i32, i32
  }
}

module attributes {stable_mosaic.version = 11 : i64} {
  func.func @_bn_norm_kernel(%arg0: i32, %arg1: memref<128x128xbf16, #tpu.memory_space<vmem>>, %arg2: memref<2x128xf32, #tpu.memory_space<vmem>>, %arg3: memref<1x128xf32, #tpu.memory_space<vmem>>, %arg4: memref<1x128xf32, #tpu.memory_space<vmem>>, %arg5: memref<128x128xbf16, #tpu.memory_space<vmem>>, %arg6: memref<128x128xf32, #tpu.memory_space<vmem>>) attributes {dimension_semantics = [#tpu.dimension_semantics<parallel>], iteration_bounds = array<i64: 1>, scalar_prefetch = 0 : i64, scratch_operands = 0 : i64, tpu.core_type = #tpu.core_type<tc>, window_params = [{transform_indices = @transform_0, window_bounds = array<i64: 128, 128>}, {pipeline_mode = #tpu.pipeline_mode<synchronous>, transform_indices = @transform_1, window_bounds = array<i64: 2, 128>}, {pipeline_mode = #tpu.pipeline_mode<synchronous>, transform_indices = @transform_2, window_bounds = array<i64: 1, 128>}, {pipeline_mode = #tpu.pipeline_mode<synchronous>, transform_indices = @transform_3, window_bounds = array<i64: 1, 128>}, {transform_indices = @transform_4, window_bounds = array<i64: 128, 128>}, {transform_indices = @transform_5, window_bounds = array<i64: 128, 128>}]} {
    %c0 = arith.constant 0 : index
    %c0_0 = arith.constant 0 : index
    %0 = vector.load %arg2[%c0, %c0_0] : memref<2x128xf32, #tpu.memory_space<vmem>>, vector<1x128xf32>
    %cst = arith.constant 7.812500e-03 : f32
    %1 = vector.broadcast %cst : f32 to vector<1x128xf32>
    %2 = arith.mulf %0, %1 : vector<1x128xf32>
    %c1 = arith.constant 1 : index
    %c0_1 = arith.constant 0 : index
    %3 = vector.load %arg2[%c1, %c0_1] : memref<2x128xf32, #tpu.memory_space<vmem>>, vector<1x128xf32>
    %cst_2 = arith.constant 7.812500e-03 : f32
    %4 = vector.broadcast %cst_2 : f32 to vector<1x128xf32>
    %5 = arith.mulf %3, %4 : vector<1x128xf32>
    %6 = arith.mulf %2, %2 : vector<1x128xf32>
    %7 = arith.subf %5, %6 : vector<1x128xf32>
    %cst_3 = arith.constant 0.000000e+00 : f32
    %8 = vector.broadcast %cst_3 : f32 to vector<1x128xf32>
    %9 = arith.maximumf %7, %8 : vector<1x128xf32>
    %cst_4 = arith.constant 9.99999974E-6 : f32
    %10 = vector.broadcast %cst_4 : f32 to vector<1x128xf32>
    %11 = arith.addf %9, %10 : vector<1x128xf32>
    %12 = math.rsqrt %11 : vector<1x128xf32>
    %c0_5 = arith.constant 0 : index
    %c0_6 = arith.constant 0 : index
    %13 = vector.load %arg3[%c0_5, %c0_6] : memref<1x128xf32, #tpu.memory_space<vmem>>, vector<1x128xf32>
    %14 = arith.mulf %13, %12 : vector<1x128xf32>
    %c0_7 = arith.constant 0 : index
    %c0_8 = arith.constant 0 : index
    %15 = vector.load %arg4[%c0_7, %c0_8] : memref<1x128xf32, #tpu.memory_space<vmem>>, vector<1x128xf32>
    %16 = arith.mulf %2, %14 : vector<1x128xf32>
    %17 = arith.subf %15, %16 : vector<1x128xf32>
    %c0_9 = arith.constant 0 : index
    %c0_10 = arith.constant 0 : index
    %18 = vector.load %arg1[%c0_9, %c0_10] : memref<128x128xbf16, #tpu.memory_space<vmem>>, vector<128x128xbf16>
    %19 = arith.extf %18 : vector<128x128xbf16> to vector<128x128xf32>
    %20 = vector.broadcast %14 : vector<1x128xf32> to vector<128x128xf32>
    %21 = arith.mulf %19, %20 : vector<128x128xf32>
    %22 = vector.broadcast %17 : vector<1x128xf32> to vector<128x128xf32>
    %23 = arith.addf %21, %22 : vector<128x128xf32>
    %c0_11 = arith.constant 0 : index
    %c0_12 = arith.constant 0 : index
    %24 = vector.load %arg5[%c0_11, %c0_12] : memref<128x128xbf16, #tpu.memory_space<vmem>>, vector<128x128xbf16>
    %25 = arith.extf %24 : vector<128x128xbf16> to vector<128x128xf32>
    %26 = arith.addf %23, %25 : vector<128x128xf32>
    %cst_13 = arith.constant 0.000000e+00 : f32
    %27 = vector.broadcast %cst_13 : f32 to vector<128x128xf32>
    %28 = arith.maximumf %26, %27 : vector<128x128xf32>
    %c0_14 = arith.constant 0 : index
    %c0_15 = arith.constant 0 : index
    %29 = vector.load %arg6[%c0_14, %c0_15] : memref<128x128xf32, #tpu.memory_space<vmem>>, vector<128x128xf32>
    tpu.vector_store %arg6[%c0_14, %c0_15], %28 {strides = array<i32>} : memref<128x128xf32, #tpu.memory_space<vmem>>, vector<128x128xf32>,
    return
  }
  func.func @transform_0(%arg0: i32) -> (i32, i32) {
    %c0_i32 = arith.constant 0 : i32
    %c0_i32_0 = arith.constant 0 : i32
    return %arg0, %c0_i32 : i32, i32
  }
  func.func @transform_1(%arg0: i32) -> (i32, i32) {
    %c0_i32 = arith.constant 0 : i32
    %c0_i32_0 = arith.constant 0 : i32
    %c0_i32_1 = arith.constant 0 : i32
    return %c0_i32, %c0_i32_0 : i32, i32
  }
  func.func @transform_2(%arg0: i32) -> (i32, i32) {
    %c0_i32 = arith.constant 0 : i32
    %c0_i32_0 = arith.constant 0 : i32
    %c0_i32_1 = arith.constant 0 : i32
    return %c0_i32, %c0_i32_0 : i32, i32
  }
  func.func @transform_3(%arg0: i32) -> (i32, i32) {
    %c0_i32 = arith.constant 0 : i32
    %c0_i32_0 = arith.constant 0 : i32
    %c0_i32_1 = arith.constant 0 : i32
    return %c0_i32, %c0_i32_0 : i32, i32
  }
  func.func @transform_4(%arg0: i32) -> (i32, i32) {
    %c0_i32 = arith.constant 0 : i32
    %c0_i32_0 = arith.constant 0 : i32
    return %arg0, %c0_i32 : i32, i32
  }
  func.func @transform_5(%arg0: i32) -> (i32, i32) {
    %c0_i32 = arith.constant 0 : i32
    %c0_i32_0 = arith.constant 0 : i32
    return %arg0, %c0_i32 : i32, i32
  }
}

</mosaic_0001>

<llo_original>
// kernel: basic_block_geo_forward.4
$region0: #{basic_block_geo_forward.4}
  #allocation0 [shape = 'u32[]', space=smem, size = 0x4, offset = 0x4, fixed_abs, tag = 'smem constant byte address 0x4 - core index']
  #allocation1 [shape = 'u32[72,128]{1,0:T(1,128)}', space=vmem, size = 0x9000, scoped, tag = 'internal scratch']
  %s0 = inlined_call_operand.vmem [shape: bf16[128,128], index: 0, kind: input, shape index: {}]
  %s1 = inlined_call_operand.vmem [shape: bf16[128,128], index: 1, kind: input, shape index: {}]
  %s2 = inlined_call_operand.vmem [shape: bf16[128,128], index: 2, kind: output, shape index: {0}]
  %s3 = inlined_call_operand.vmem [shape: f32[1,2,128], index: 3, kind: output, shape index: {1}]
  %4 = xla_tuple %s2, %s3
  %s5 = sld [smem:[#allocation0]]
  $region26: #{basic_block_geo_forward.4} parent=0
    _
  %s7 = ssub.s32 1, %s5
  %s8 = scalar_select 0, %s7, %s5
  // Predicated region
  $region2: #{basic_block_geo_forward.4} parent=0 // pred_check
    _
  $region3: #{basic_block_geo_forward.4} parent=0 // pred_check_branch
    %10 = sbr.rel (0) target = $region5
  $region4: #{basic_block_geo_forward.4} parent=0 // pred_region
    _
  $region5: #{basic_block_geo_forward.4} parent=0 // pred_fallthru
    _
  // Predicated region
  $region6: #{basic_block_geo_forward.4} parent=0 // pred_check
    _
  $region7: #{basic_block_geo_forward.4} parent=0 // pred_check_branch
    %12 = sbr.rel (0) target = $region9
  $region8: #{basic_block_geo_forward.4} parent=0 // pred_region
    _
  $region9: #{basic_block_geo_forward.4} parent=0 // pred_fallthru
    _
  %v13 = vld [vmem:[%s0] sm:$0xf]
  %v14 = vld [vmem:[%s0 + $0x4] sm:$0xf]
  %v15 = vld [vmem:[%s0 + $0x8] sm:$0xf]
  %v16 = vld [vmem:[%s0 + $0xc] sm:$0xf]
  %v17 = vld [vmem:[%s0 + $0x10] sm:$0xf]
  %v18 = vld [vmem:[%s0 + $0x14] sm:$0xf]
  %v19 = vld [vmem:[%s0 + $0x18] sm:$0xf]
  %v20 = vld [vmem:[%s0 + $0x1c] sm:$0xf]
  %v21 = vld [vmem:[%s0 + $0x20] sm:$0xf]
  %v22 = vld [vmem:[%s0 + $0x24] sm:$0xf]
  %v23 = vld [vmem:[%s0 + $0x28] sm:$0xf]
  %v24 = vld [vmem:[%s0 + $0x2c] sm:$0xf]
  %v25 = vld [vmem:[%s0 + $0x30] sm:$0xf]
  %v26 = vld [vmem:[%s0 + $0x34] sm:$0xf]
  %v27 = vld [vmem:[%s0 + $0x38] sm:$0xf]
  %v28 = vld [vmem:[%s0 + $0x3c] sm:$0xf]
  %v29 = vld [vmem:[%s1] sm:$0xf]
  %v30 = vld [vmem:[%s1 + $0x4] sm:$0xf]
  %v31 = vld [vmem:[%s1 + $0x8] sm:$0xf]
  %v32 = vld [vmem:[%s1 + $0xc] sm:$0xf]
  %v33 = vld [vmem:[%s1 + $0x10] sm:$0xf]
  %v34 = vld [vmem:[%s1 + $0x14] sm:$0xf]
  %v35 = vld [vmem:[%s1 + $0x18] sm:$0xf]
  %v36 = vld [vmem:[%s1 + $0x1c] sm:$0xf]
  %v37 = vld [vmem:[%s1 + $0x20] sm:$0xf]
  %v38 = vld [vmem:[%s1 + $0x24] sm:$0xf]
  %v39 = vld [vmem:[%s1 + $0x28] sm:$0xf]
  %v40 = vld [vmem:[%s1 + $0x2c] sm:$0xf]
  %v41 = vld [vmem:[%s1 + $0x30] sm:$0xf]
  %v42 = vld [vmem:[%s1 + $0x34] sm:$0xf]
  %v43 = vld [vmem:[%s1 + $0x38] sm:$0xf]
  %v44 = vld [vmem:[%s1 + $0x3c] sm:$0xf]
  %v61 = vunpack.c.l.b16 %v13
  %v62 = vunpack.c.l.b16 %v14
  %v63 = vunpack.c.l.b16 %v15
  %v64 = vunpack.c.l.b16 %v16
  %v65 = vunpack.c.l.b16 %v17
  %v66 = vunpack.c.l.b16 %v18
  %v67 = vunpack.c.l.b16 %v19
  %v68 = vunpack.c.l.b16 %v20
  %v69 = vunpack.c.l.b16 %v21
  %v70 = vunpack.c.l.b16 %v22
  %v71 = vunpack.c.l.b16 %v23
  %v72 = vunpack.c.l.b16 %v24
  %v73 = vunpack.c.l.b16 %v25
  %v74 = vunpack.c.l.b16 %v26
  %v75 = vunpack.c.l.b16 %v27
  %v76 = vunpack.c.l.b16 %v28
  %v77 = vpack.c.b16 %v62, %v61
  %v78 = vpack.c.b16 %v64, %v63
  %v79 = vpack.c.b16 %v66, %v65
  %v80 = vpack.c.b16 %v68, %v67
  %v81 = vpack.c.b16 %v70, %v69
  %v82 = vpack.c.b16 %v72, %v71
  %v83 = vpack.c.b16 %v74, %v73
  %v84 = vpack.c.b16 %v76, %v75
  %v109 = vunpack.c.l.b16 %v29
  %v110 = vunpack.c.l.b16 %v30
  %v111 = vunpack.c.l.b16 %v31
  %v112 = vunpack.c.l.b16 %v32
  %v113 = vunpack.c.l.b16 %v33
  %v114 = vunpack.c.l.b16 %v34
  %v115 = vunpack.c.l.b16 %v35
  %v116 = vunpack.c.l.b16 %v36
  %v117 = vunpack.c.l.b16 %v37
  %v118 = vunpack.c.l.b16 %v38
  %v119 = vunpack.c.l.b16 %v39
  %v120 = vunpack.c.l.b16 %v40
  %v121 = vunpack.c.l.b16 %v41
  %v122 = vunpack.c.l.b16 %v42
  %v123 = vunpack.c.l.b16 %v43
  %v124 = vunpack.c.l.b16 %v44
  %v125 = vpack.c.b16 %v110, %v109
  %v126 = vpack.c.b16 %v112, %v111
  %v127 = vpack.c.b16 %v114, %v113
  %v128 = vpack.c.b16 %v116, %v115
  %v129 = vpack.c.b16 %v118, %v117
  %v130 = vpack.c.b16 %v120, %v119
  %v131 = vpack.c.b16 %v122, %v121
  %v132 = vpack.c.b16 %v124, %v123
  %141 = vmatpush.bf16.msra.mxu0 %v132
  %142 = vmatpush.bf16.msra.mxu0 %v131
  %143 = vmatpush.bf16.msra.mxu0 %v130
  %144 = vmatpush.bf16.msra.mxu0 %v129
  %145 = vmatpush.bf16.msra.mxu0 %v128
  %146 = vmatpush.bf16.msra.mxu0 %v127
  %147 = vmatpush.bf16.msra.mxu0 %v126
  %148 = vmatpush.bf16.msra.mxu0 %v125
  %149 = vmatmul.bf16.gmra.mxu0 %v77
  %v150 = vpop.f32.mrf.mxu0
  %v151 = vadd.f32 0.0, %v150
  %v152 = vpop.f32.mrf.mxu0
  %v153 = vadd.f32 0.0, %v152
  %154 = vmatmul.bf16.gmra.mxu0 %v78
  %v155 = vpop.f32.mrf.mxu0
  %v156 = vadd.f32 0.0, %v155
  %v157 = vpop.f32.mrf.mxu0
  %v158 = vadd.f32 0.0, %v157
  %159 = vmatmul.bf16.gmra.mxu0 %v79
  %v160 = vpop.f32.mrf.mxu0
  %v161 = vadd.f32 0.0, %v160
  %v162 = vpop.f32.mrf.mxu0
  %v163 = vadd.f32 0.0, %v162
  %164 = vmatmul.bf16.gmra.mxu0 %v80
  %v165 = vpop.f32.mrf.mxu0
  %v166 = vadd.f32 0.0, %v165
  %v167 = vpop.f32.mrf.mxu0
  %v168 = vadd.f32 0.0, %v167
  %169 = vmatmul.bf16.gmra.mxu0 %v81
  %v170 = vpop.f32.mrf.mxu0
  %v171 = vadd.f32 0.0, %v170
  %v172 = vpop.f32.mrf.mxu0
  %v173 = vadd.f32 0.0, %v172
  %174 = vmatmul.bf16.gmra.mxu0 %v82
  %v175 = vpop.f32.mrf.mxu0
  %v176 = vadd.f32 0.0, %v175
  %v177 = vpop.f32.mrf.mxu0
  %v178 = vadd.f32 0.0, %v177
  %179 = vmatmul.bf16.gmra.mxu0 %v83
  %v180 = vpop.f32.mrf.mxu0
  %v181 = vadd.f32 0.0, %v180
  %v182 = vpop.f32.mrf.mxu0
  %v183 = vadd.f32 0.0, %v182
  %184 = vmatmul.bf16.gmra.mxu0 %v84
  %v185 = vpop.f32.mrf.mxu0
  %v186 = vadd.f32 0.0, %v185
  %v187 = vpop.f32.mrf.mxu0
  %v188 = vadd.f32 0.0, %v187
  %189 = vdwg.mxu0
  %v190 = vpack.c.bf16 %v151, %v151
  %v191 = vpack.c.bf16 %v153, %v153
  %v192 = vpack.c.bf16 %v156, %v156
  %v193 = vpack.c.bf16 %v158, %v158
  %v194 = vpack.c.bf16 %v161, %v161
  %v195 = vpack.c.bf16 %v163, %v163
  %v196 = vpack.c.bf16 %v166, %v166
  %v197 = vpack.c.bf16 %v168, %v168
  %v198 = vpack.c.bf16 %v171, %v171
  %v199 = vpack.c.bf16 %v173, %v173
  %v200 = vpack.c.bf16 %v176, %v176
  %v201 = vpack.c.bf16 %v178, %v178
  %v202 = vpack.c.bf16 %v181, %v181
  %v203 = vpack.c.bf16 %v183, %v183
  %v204 = vpack.c.bf16 %v186, %v186
  %v205 = vpack.c.bf16 %v188, %v188
  %206 = vst [vmem:[%s2] sm:$0xf] %v190
  %207 = vst [vmem:[%s2 + $0x4] sm:$0xf] %v191
  %208 = vst [vmem:[%s2 + $0x8] sm:$0xf] %v192
  %209 = vst [vmem:[%s2 + $0xc] sm:$0xf] %v193
  %210 = vst [vmem:[%s2 + $0x10] sm:$0xf] %v194
  %211 = vst [vmem:[%s2 + $0x14] sm:$0xf] %v195
  %212 = vst [vmem:[%s2 + $0x18] sm:$0xf] %v196
  %213 = vst [vmem:[%s2 + $0x1c] sm:$0xf] %v197
  %214 = vst [vmem:[%s2 + $0x20] sm:$0xf] %v198
  %215 = vst [vmem:[%s2 + $0x24] sm:$0xf] %v199
  %216 = vst [vmem:[%s2 + $0x28] sm:$0xf] %v200
  %217 = vst [vmem:[%s2 + $0x2c] sm:$0xf] %v201
  %218 = vst [vmem:[%s2 + $0x30] sm:$0xf] %v202
  %219 = vst [vmem:[%s2 + $0x34] sm:$0xf] %v203
  %220 = vst [vmem:[%s2 + $0x38] sm:$0xf] %v204
  %221 = vst [vmem:[%s2 + $0x3c] sm:$0xf] %v205
  %v222 = vadd.f32 %v151, %v153
  %v223 = vadd.f32 %v222, %v156
  %v224 = vadd.f32 %v223, %v158
  %v225 = vadd.f32 %v224, %v161
  %v226 = vadd.f32 %v225, %v163
  %v227 = vadd.f32 %v226, %v166
  %v228 = vadd.f32 %v227, %v168
  %v229 = vadd.f32 %v228, %v171
  %v230 = vadd.f32 %v229, %v173
  %v231 = vadd.f32 %v230, %v176
  %v232 = vadd.f32 %v231, %v178
  %v233 = vadd.f32 %v232, %v181
  %v234 = vadd.f32 %v233, %v183
  %v235 = vadd.f32 %v234, %v186
  %v236 = vadd.f32 %v235, %v188
  %v237 = vrot.slane %v236, 4
  %v238 = vadd.f32 %v236, %v237
  %v239 = vrot.slane %v238, 2
  %v240 = vadd.f32 %v238, %v239
  %v241 = vrot.slane %v240, 1
  %v242 = vadd.f32 %v240, %v241
  %v243 = vmul.f32 %v151, %v151
  %v244 = vmul.f32 %v153, %v153
  %v245 = vmul.f32 %v156, %v156
  %v246 = vmul.f32 %v158, %v158
  %v247 = vmul.f32 %v161, %v161
  %v248 = vmul.f32 %v163, %v163
  %v249 = vmul.f32 %v166, %v166
  %v250 = vmul.f32 %v168, %v168
  %v251 = vmul.f32 %v171, %v171
  %v252 = vmul.f32 %v173, %v173
  %v253 = vmul.f32 %v176, %v176
  %v254 = vmul.f32 %v178, %v178
  %v255 = vmul.f32 %v181, %v181
  %v256 = vmul.f32 %v183, %v183
  %v257 = vmul.f32 %v186, %v186
  %v258 = vmul.f32 %v188, %v188
  %v259 = vadd.f32 %v243, %v244
  %v260 = vadd.f32 %v259, %v245
  %v261 = vadd.f32 %v260, %v246
  %v262 = vadd.f32 %v261, %v247
  %v263 = vadd.f32 %v262, %v248
  %v264 = vadd.f32 %v263, %v249
  %v265 = vadd.f32 %v264, %v250
  %v266 = vadd.f32 %v265, %v251
  %v267 = vadd.f32 %v266, %v252
  %v268 = vadd.f32 %v267, %v253
  %v269 = vadd.f32 %v268, %v254
  %v270 = vadd.f32 %v269, %v255
  %v271 = vadd.f32 %v270, %v256
  %v272 = vadd.f32 %v271, %v257
  %v273 = vadd.f32 %v272, %v258
  %v274 = vrot.slane %v273, 4
  %v275 = vadd.f32 %v273, %v274
  %v276 = vrot.slane %v275, 2
  %v277 = vadd.f32 %v275, %v276
  %v278 = vrot.slane %v277, 1
  %v279 = vadd.f32 %v277, %v278
  %vm280 = vcmask 1040384
  %v281 = vsel %vm280, %v242, %v279
  %282 = vst [vmem:[%s3] sm:$0x3] %v281
  // Predicated region
  $region10: #{basic_block_geo_forward.4} parent=0 // pred_check
    _
  $region11: #{basic_block_geo_forward.4} parent=0 // pred_check_branch
    %284 = sbr.rel (0) target = $region13
  $region12: #{basic_block_geo_forward.4} parent=0 // pred_region
    _
  $region13: #{basic_block_geo_forward.4} parent=0 // pred_fallthru
    _
  // Predicated region
  $region14: #{basic_block_geo_forward.4} parent=0 // pred_check
    _
  $region15: #{basic_block_geo_forward.4} parent=0 // pred_check_branch
    %286 = sbr.rel (0) target = $region17
  $region16: #{basic_block_geo_forward.4} parent=0 // pred_region
    _
  $region17: #{basic_block_geo_forward.4} parent=0 // pred_fallthru
    _
  // Predicated region
  $region18: #{basic_block_geo_forward.4} parent=0 // pred_check
    _
  $region19: #{basic_block_geo_forward.4} parent=0 // pred_check_branch
    %288 = sbr.rel (0) target = $region21
  $region20: #{basic_block_geo_forward.4} parent=0 // pred_region
    _
  $region21: #{basic_block_geo_forward.4} parent=0 // pred_fallthru
    _
  // Predicated region
  $region22: #{basic_block_geo_forward.4} parent=0 // pred_check
    _
  $region23: #{basic_block_geo_forward.4} parent=0 // pred_check_branch
    %290 = sbr.rel (0) target = $region25
  $region24: #{basic_block_geo_forward.4} parent=0 // pred_region
    _
  $region25: #{basic_block_geo_forward.4} parent=0 // pred_fallthru
    _

// kernel: basic_block_geo_forward.5
$region0: #{basic_block_geo_forward.5}
  #allocation0 [shape = 'u32[]', space=smem, size = 0x4, offset = 0x4, fixed_abs, tag = 'smem constant byte address 0x4 - core index']
  #allocation1 [shape = 'u32[72,128]{1,0:T(1,128)}', space=vmem, size = 0x9000, scoped, tag = 'internal scratch']
  %s0 = inlined_call_operand.vmem [shape: bf16[128,128], index: 0, kind: input, shape index: {}]
  %s1 = inlined_call_operand.vmem [shape: f32[2,128], index: 1, kind: input, shape index: {}]
  %s2 = inlined_call_operand.vmem [shape: f32[1,128], index: 2, kind: input, shape index: {}]
  %s3 = inlined_call_operand.vmem [shape: f32[1,128], index: 3, kind: input, shape index: {}]
  %s4 = inlined_call_operand.vmem [shape: bf16[128,128], index: 4, kind: output, shape index: {}]
  %s5 = sld [smem:[#allocation0]]
  $region26: #{basic_block_geo_forward.5} parent=0
    _
  %s7 = ssub.s32 1, %s5
  %s8 = scalar_select 0, %s7, %s5
  // Predicated region
  $region2: #{basic_block_geo_forward.5} parent=0 // pred_check
    _
  $region3: #{basic_block_geo_forward.5} parent=0 // pred_check_branch
    %10 = sbr.rel (0) target = $region5
  $region4: #{basic_block_geo_forward.5} parent=0 // pred_region
    _
  $region5: #{basic_block_geo_forward.5} parent=0 // pred_fallthru
    _
  // Predicated region
  $region6: #{basic_block_geo_forward.5} parent=0 // pred_check
    _
  $region7: #{basic_block_geo_forward.5} parent=0 // pred_check_branch
    %12 = sbr.rel (0) target = $region9
  $region8: #{basic_block_geo_forward.5} parent=0 // pred_region
    _
  $region9: #{basic_block_geo_forward.5} parent=0 // pred_fallthru
    _
  // Predicated region
  $region10: #{basic_block_geo_forward.5} parent=0 // pred_check
    _
  $region11: #{basic_block_geo_forward.5} parent=0 // pred_check_branch
    %14 = sbr.rel (0) target = $region13
  $region12: #{basic_block_geo_forward.5} parent=0 // pred_region
    _
  $region13: #{basic_block_geo_forward.5} parent=0 // pred_fallthru
    _
  // Predicated region
  $region14: #{basic_block_geo_forward.5} parent=0 // pred_check
    _
  $region15: #{basic_block_geo_forward.5} parent=0 // pred_check_branch
    %16 = sbr.rel (0) target = $region17
  $region16: #{basic_block_geo_forward.5} parent=0 // pred_region
    _
  $region17: #{basic_block_geo_forward.5} parent=0 // pred_fallthru
    _
  %v17 = vld [vmem:[%s1] sm:$0x1]
  %v18 = vmul.f32 %v17, 0.0078125
  %v19 = vld [vmem:[%s1 + $0x1] sm:$0x1]
  %v20 = vmul.f32 %v19, 0.0078125
  %v21 = vmul.f32 %v18, %v18
  %v22 = vsub.f32 %v20, %v21
  %v23 = vmax.f32 %v22, 0.0
  %v24 = vadd.f32 %v23, 1e-05
  %v25 = vrsqrt.pop %v24
  %v26 = vmul.f32 %v25, %v24
  %v27 = vmul.f32 %v26, %v25
  %v28 = vmul.f32 0.5, %v27
  %v29 = vsub.f32 1.5, %v28
  %v30 = vmul.f32 %v25, %v29
  %vm31 = vweird.f32 %v24
  %vm32 = vweird.f32 %v25
  %vm33 = vmor %vm31, %vm32
  %v34 = vsel %vm33, %v25, %v30
  %v35 = vld [vmem:[%s2] sm:$0x1]
  %v36 = vmul.f32 %v35, %v34
  %v37 = vld [vmem:[%s3] sm:$0x1]
  %v38 = vmul.f32 %v18, %v36
  %v39 = vsub.f32 %v37, %v38
  %v40 = vld [vmem:[%s0] sm:$0xf]
  %v41 = vld [vmem:[%s0 + $0x4] sm:$0xf]
  %v42 = vld [vmem:[%s0 + $0x8] sm:$0xf]
  %v43 = vld [vmem:[%s0 + $0xc] sm:$0xf]
  %v44 = vld [vmem:[%s0 + $0x10] sm:$0xf]
  %v45 = vld [vmem:[%s0 + $0x14] sm:$0xf]
  %v46 = vld [vmem:[%s0 + $0x18] sm:$0xf]
  %v47 = vld [vmem:[%s0 + $0x1c] sm:$0xf]
  %v48 = vld [vmem:[%s0 + $0x20] sm:$0xf]
  %v49 = vld [vmem:[%s0 + $0x24] sm:$0xf]
  %v50 = vld [vmem:[%s0 + $0x28] sm:$0xf]
  %v51 = vld [vmem:[%s0 + $0x2c] sm:$0xf]
  %v52 = vld [vmem:[%s0 + $0x30] sm:$0xf]
  %v53 = vld [vmem:[%s0 + $0x34] sm:$0xf]
  %v54 = vld [vmem:[%s0 + $0x38] sm:$0xf]
  %v55 = vld [vmem:[%s0 + $0x3c] sm:$0xf]
  %v56 = vunpack.c.l.bf16 %v40
  %v57 = vunpack.c.l.bf16 %v41
  %v58 = vunpack.c.l.bf16 %v42
  %v59 = vunpack.c.l.bf16 %v43
  %v60 = vunpack.c.l.bf16 %v44
  %v61 = vunpack.c.l.bf16 %v45
  %v62 = vunpack.c.l.bf16 %v46
  %v63 = vunpack.c.l.bf16 %v47
  %v64 = vunpack.c.l.bf16 %v48
  %v65 = vunpack.c.l.bf16 %v49
  %v66 = vunpack.c.l.bf16 %v50
  %v67 = vunpack.c.l.bf16 %v51
  %v68 = vunpack.c.l.bf16 %v52
  %v69 = vunpack.c.l.bf16 %v53
  %v70 = vunpack.c.l.bf16 %v54
  %v71 = vunpack.c.l.bf16 %v55
  %v73 = vperm.slane %v36, 0
  %v75 = vmul.f32 %v56, %v73
  %v76 = vmul.f32 %v57, %v73
  %v77 = vmul.f32 %v58, %v73
  %v78 = vmul.f32 %v59, %v73
  %v79 = vmul.f32 %v60, %v73
  %v80 = vmul.f32 %v61, %v73
  %v81 = vmul.f32 %v62, %v73
  %v82 = vmul.f32 %v63, %v73
  %v83 = vmul.f32 %v64, %v73
  %v84 = vmul.f32 %v65, %v73
  %v85 = vmul.f32 %v66, %v73
  %v86 = vmul.f32 %v67, %v73
  %v87 = vmul.f32 %v68, %v73
  %v88 = vmul.f32 %v69, %v73
  %v89 = vmul.f32 %v70, %v73
  %v90 = vmul.f32 %v71, %v73
  %v92 = vperm.slane %v39, 0
  %v94 = vadd.f32 %v75, %v92
  %v95 = vadd.f32 %v76, %v92
  %v96 = vadd.f32 %v77, %v92
  %v97 = vadd.f32 %v78, %v92
  %v98 = vadd.f32 %v79, %v92
  %v99 = vadd.f32 %v80, %v92
  %v100 = vadd.f32 %v81, %v92
  %v101 = vadd.f32 %v82, %v92
  %v102 = vadd.f32 %v83, %v92
  %v103 = vadd.f32 %v84, %v92
  %v104 = vadd.f32 %v85, %v92
  %v105 = vadd.f32 %v86, %v92
  %v106 = vadd.f32 %v87, %v92
  %v107 = vadd.f32 %v88, %v92
  %v108 = vadd.f32 %v89, %v92
  %v109 = vadd.f32 %v90, %v92
  %v110 = vlaneseq
  %v111 = vand.u32 %v110, 127
  %vm112 = vcmp.lt.s32.totalorder %v111, 8
  %v113 = vmax.f32 %v94, 0.0
  %v114 = vmax.f32 %v95, 0.0
  %v115 = vmax.f32 %v96, 0.0
  %v116 = vmax.f32 %v97, 0.0
  %v117 = vmax.f32 %v98, 0.0
  %v118 = vmax.f32 %v99, 0.0
  %v119 = vmax.f32 %v100, 0.0
  %v120 = vmax.f32 %v101, 0.0
  %v121 = vmax.f32 %v102, 0.0
  %v122 = vmax.f32 %v103, 0.0
  %v123 = vmax.f32 %v104, 0.0
  %v124 = vmax.f32 %v105, 0.0
  %v125 = vmax.f32 %v106, 0.0
  %v126 = vmax.f32 %v107, 0.0
  %v127 = vmax.f32 %v108, 0.0
  %v128 = vmax.f32 %v109, 0.0
  %v129 = vsel %vm112, %v113, %v94
  %v130 = vsel %vm112, %v114, %v95
  %v131 = vsel %vm112, %v115, %v96
  %v132 = vsel %vm112, %v116, %v97
  %v133 = vsel %vm112, %v117, %v98
  %v134 = vsel %vm112, %v118, %v99
  %v135 = vsel %vm112, %v119, %v100
  %v136 = vsel %vm112, %v120, %v101
  %v137 = vsel %vm112, %v121, %v102
  %v138 = vsel %vm112, %v122, %v103
  %v139 = vsel %vm112, %v123, %v104
  %v140 = vsel %vm112, %v124, %v105
  %v141 = vsel %vm112, %v125, %v106
  %v142 = vsel %vm112, %v126, %v107
  %v143 = vsel %vm112, %v127, %v108
  %v144 = vsel %vm112, %v128, %v109
  %v145 = vpack.c.bf16 %v129, %v129
  %v146 = vpack.c.bf16 %v130, %v130
  %v147 = vpack.c.bf16 %v131, %v131
  %v148 = vpack.c.bf16 %v132, %v132
  %v149 = vpack.c.bf16 %v133, %v133
  %v150 = vpack.c.bf16 %v134, %v134
  %v151 = vpack.c.bf16 %v135, %v135
  %v152 = vpack.c.bf16 %v136, %v136
  %v153 = vpack.c.bf16 %v137, %v137
  %v154 = vpack.c.bf16 %v138, %v138
  %v155 = vpack.c.bf16 %v139, %v139
  %v156 = vpack.c.bf16 %v140, %v140
  %v157 = vpack.c.bf16 %v141, %v141
  %v158 = vpack.c.bf16 %v142, %v142
  %v159 = vpack.c.bf16 %v143, %v143
  %v160 = vpack.c.bf16 %v144, %v144
  %161 = vst [vmem:[%s4] sm:$0xf] %v145
  %162 = vst [vmem:[%s4 + $0x4] sm:$0xf] %v146
  %163 = vst [vmem:[%s4 + $0x8] sm:$0xf] %v147
  %164 = vst [vmem:[%s4 + $0xc] sm:$0xf] %v148
  %165 = vst [vmem:[%s4 + $0x10] sm:$0xf] %v149
  %166 = vst [vmem:[%s4 + $0x14] sm:$0xf] %v150
  %167 = vst [vmem:[%s4 + $0x18] sm:$0xf] %v151
  %168 = vst [vmem:[%s4 + $0x1c] sm:$0xf] %v152
  %169 = vst [vmem:[%s4 + $0x20] sm:$0xf] %v153
  %170 = vst [vmem:[%s4 + $0x24] sm:$0xf] %v154
  %171 = vst [vmem:[%s4 + $0x28] sm:$0xf] %v155
  %172 = vst [vmem:[%s4 + $0x2c] sm:$0xf] %v156
  %173 = vst [vmem:[%s4 + $0x30] sm:$0xf] %v157
  %174 = vst [vmem:[%s4 + $0x34] sm:$0xf] %v158
  %175 = vst [vmem:[%s4 + $0x38] sm:$0xf] %v159
  %176 = vst [vmem:[%s4 + $0x3c] sm:$0xf] %v160
  // Predicated region
  $region18: #{basic_block_geo_forward.5} parent=0 // pred_check
    _
  $region19: #{basic_block_geo_forward.5} parent=0 // pred_check_branch
    %178 = sbr.rel (0) target = $region21
  $region20: #{basic_block_geo_forward.5} parent=0 // pred_region
    _
  $region21: #{basic_block_geo_forward.5} parent=0 // pred_fallthru
    _
  // Predicated region
  $region22: #{basic_block_geo_forward.5} parent=0 // pred_check
    _
  $region23: #{basic_block_geo_forward.5} parent=0 // pred_check_branch
    %180 = sbr.rel (0) target = $region25
  $region24: #{basic_block_geo_forward.5} parent=0 // pred_region
    _
  $region25: #{basic_block_geo_forward.5} parent=0 // pred_fallthru
    _

// kernel: basic_block_geo_forward.7
$region0: #{basic_block_geo_forward.7}
  #allocation0 [shape = 'u32[]', space=smem, size = 0x4, offset = 0x4, fixed_abs, tag = 'smem constant byte address 0x4 - core index']
  #allocation1 [shape = 'u32[72,128]{1,0:T(1,128)}', space=vmem, size = 0x9000, scoped, tag = 'internal scratch']
  %s0 = inlined_call_operand.vmem [shape: bf16[128,128], index: 0, kind: input, shape index: {}]
  %s1 = inlined_call_operand.vmem [shape: f32[2,128], index: 1, kind: input, shape index: {}]
  %s2 = inlined_call_operand.vmem [shape: f32[1,128], index: 2, kind: input, shape index: {}]
  %s3 = inlined_call_operand.vmem [shape: f32[1,128], index: 3, kind: input, shape index: {}]
  %s4 = inlined_call_operand.vmem [shape: bf16[128,128], index: 4, kind: input, shape index: {}]
  %s5 = inlined_call_operand.vmem [shape: f32[128,128], index: 5, kind: output, shape index: {}]
  %s6 = sld [smem:[#allocation0]]
  $region30: #{basic_block_geo_forward.7} parent=0
    _
  %s8 = ssub.s32 1, %s6
  %s9 = scalar_select 0, %s8, %s6
  // Predicated region
  $region2: #{basic_block_geo_forward.7} parent=0 // pred_check
    _
  $region3: #{basic_block_geo_forward.7} parent=0 // pred_check_branch
    %11 = sbr.rel (0) target = $region5
  $region4: #{basic_block_geo_forward.7} parent=0 // pred_region
    _
  $region5: #{basic_block_geo_forward.7} parent=0 // pred_fallthru
    _
  // Predicated region
  $region6: #{basic_block_geo_forward.7} parent=0 // pred_check
    _
  $region7: #{basic_block_geo_forward.7} parent=0 // pred_check_branch
    %13 = sbr.rel (0) target = $region9
  $region8: #{basic_block_geo_forward.7} parent=0 // pred_region
    _
  $region9: #{basic_block_geo_forward.7} parent=0 // pred_fallthru
    _
  // Predicated region
  $region10: #{basic_block_geo_forward.7} parent=0 // pred_check
    _
  $region11: #{basic_block_geo_forward.7} parent=0 // pred_check_branch
    %15 = sbr.rel (0) target = $region13
  $region12: #{basic_block_geo_forward.7} parent=0 // pred_region
    _
  $region13: #{basic_block_geo_forward.7} parent=0 // pred_fallthru
    _
  // Predicated region
  $region14: #{basic_block_geo_forward.7} parent=0 // pred_check
    _
  $region15: #{basic_block_geo_forward.7} parent=0 // pred_check_branch
    %17 = sbr.rel (0) target = $region17
  $region16: #{basic_block_geo_forward.7} parent=0 // pred_region
    _
  $region17: #{basic_block_geo_forward.7} parent=0 // pred_fallthru
    _
  // Predicated region
  $region18: #{basic_block_geo_forward.7} parent=0 // pred_check
    _
  $region19: #{basic_block_geo_forward.7} parent=0 // pred_check_branch
    %19 = sbr.rel (0) target = $region21
  $region20: #{basic_block_geo_forward.7} parent=0 // pred_region
    _
  $region21: #{basic_block_geo_forward.7} parent=0 // pred_fallthru
    _
  %v20 = vld [vmem:[%s1] sm:$0x1]
  %v21 = vmul.f32 %v20, 0.0078125
  %v22 = vld [vmem:[%s1 + $0x1] sm:$0x1]
  %v23 = vmul.f32 %v22, 0.0078125
  %v24 = vmul.f32 %v21, %v21
  %v25 = vsub.f32 %v23, %v24
  %v26 = vmax.f32 %v25, 0.0
  %v27 = vadd.f32 %v26, 1e-05
  %v28 = vrsqrt.pop %v27
  %v29 = vmul.f32 %v28, %v27
  %v30 = vmul.f32 %v29, %v28
  %v31 = vmul.f32 0.5, %v30
  %v32 = vsub.f32 1.5, %v31
  %v33 = vmul.f32 %v28, %v32
  %vm34 = vweird.f32 %v27
  %vm35 = vweird.f32 %v28
  %vm36 = vmor %vm34, %vm35
  %v37 = vsel %vm36, %v28, %v33
  %v38 = vld [vmem:[%s2] sm:$0x1]
  %v39 = vmul.f32 %v38, %v37
  %v40 = vld [vmem:[%s3] sm:$0x1]
  %v41 = vmul.f32 %v21, %v39
  %v42 = vsub.f32 %v40, %v41
  %v43 = vld [vmem:[%s0] sm:$0xf]
  %v44 = vld [vmem:[%s0 + $0x4] sm:$0xf]
  %v45 = vld [vmem:[%s0 + $0x8] sm:$0xf]
  %v46 = vld [vmem:[%s0 + $0xc] sm:$0xf]
  %v47 = vld [vmem:[%s0 + $0x10] sm:$0xf]
  %v48 = vld [vmem:[%s0 + $0x14] sm:$0xf]
  %v49 = vld [vmem:[%s0 + $0x18] sm:$0xf]
  %v50 = vld [vmem:[%s0 + $0x1c] sm:$0xf]
  %v51 = vld [vmem:[%s0 + $0x20] sm:$0xf]
  %v52 = vld [vmem:[%s0 + $0x24] sm:$0xf]
  %v53 = vld [vmem:[%s0 + $0x28] sm:$0xf]
  %v54 = vld [vmem:[%s0 + $0x2c] sm:$0xf]
  %v55 = vld [vmem:[%s0 + $0x30] sm:$0xf]
  %v56 = vld [vmem:[%s0 + $0x34] sm:$0xf]
  %v57 = vld [vmem:[%s0 + $0x38] sm:$0xf]
  %v58 = vld [vmem:[%s0 + $0x3c] sm:$0xf]
  %v59 = vunpack.c.l.bf16 %v43
  %v60 = vunpack.c.l.bf16 %v44
  %v61 = vunpack.c.l.bf16 %v45
  %v62 = vunpack.c.l.bf16 %v46
  %v63 = vunpack.c.l.bf16 %v47
  %v64 = vunpack.c.l.bf16 %v48
  %v65 = vunpack.c.l.bf16 %v49
  %v66 = vunpack.c.l.bf16 %v50
  %v67 = vunpack.c.l.bf16 %v51
  %v68 = vunpack.c.l.bf16 %v52
  %v69 = vunpack.c.l.bf16 %v53
  %v70 = vunpack.c.l.bf16 %v54
  %v71 = vunpack.c.l.bf16 %v55
  %v72 = vunpack.c.l.bf16 %v56
  %v73 = vunpack.c.l.bf16 %v57
  %v74 = vunpack.c.l.bf16 %v58
  %v76 = vperm.slane %v39, 0
  %v78 = vmul.f32 %v59, %v76
  %v79 = vmul.f32 %v60, %v76
  %v80 = vmul.f32 %v61, %v76
  %v81 = vmul.f32 %v62, %v76
  %v82 = vmul.f32 %v63, %v76
  %v83 = vmul.f32 %v64, %v76
  %v84 = vmul.f32 %v65, %v76
  %v85 = vmul.f32 %v66, %v76
  %v86 = vmul.f32 %v67, %v76
  %v87 = vmul.f32 %v68, %v76
  %v88 = vmul.f32 %v69, %v76
  %v89 = vmul.f32 %v70, %v76
  %v90 = vmul.f32 %v71, %v76
  %v91 = vmul.f32 %v72, %v76
  %v92 = vmul.f32 %v73, %v76
  %v93 = vmul.f32 %v74, %v76
  %v95 = vperm.slane %v42, 0
  %v97 = vadd.f32 %v78, %v95
  %v98 = vadd.f32 %v79, %v95
  %v99 = vadd.f32 %v80, %v95
  %v100 = vadd.f32 %v81, %v95
  %v101 = vadd.f32 %v82, %v95
  %v102 = vadd.f32 %v83, %v95
  %v103 = vadd.f32 %v84, %v95
  %v104 = vadd.f32 %v85, %v95
  %v105 = vadd.f32 %v86, %v95
  %v106 = vadd.f32 %v87, %v95
  %v107 = vadd.f32 %v88, %v95
  %v108 = vadd.f32 %v89, %v95
  %v109 = vadd.f32 %v90, %v95
  %v110 = vadd.f32 %v91, %v95
  %v111 = vadd.f32 %v92, %v95
  %v112 = vadd.f32 %v93, %v95
  %v113 = vld [vmem:[%s4] sm:$0xf]
  %v114 = vld [vmem:[%s4 + $0x4] sm:$0xf]
  %v115 = vld [vmem:[%s4 + $0x8] sm:$0xf]
  %v116 = vld [vmem:[%s4 + $0xc] sm:$0xf]
  %v117 = vld [vmem:[%s4 + $0x10] sm:$0xf]
  %v118 = vld [vmem:[%s4 + $0x14] sm:$0xf]
  %v119 = vld [vmem:[%s4 + $0x18] sm:$0xf]
  %v120 = vld [vmem:[%s4 + $0x1c] sm:$0xf]
  %v121 = vld [vmem:[%s4 + $0x20] sm:$0xf]
  %v122 = vld [vmem:[%s4 + $0x24] sm:$0xf]
  %v123 = vld [vmem:[%s4 + $0x28] sm:$0xf]
  %v124 = vld [vmem:[%s4 + $0x2c] sm:$0xf]
  %v125 = vld [vmem:[%s4 + $0x30] sm:$0xf]
  %v126 = vld [vmem:[%s4 + $0x34] sm:$0xf]
  %v127 = vld [vmem:[%s4 + $0x38] sm:$0xf]
  %v128 = vld [vmem:[%s4 + $0x3c] sm:$0xf]
  %v129 = vunpack.c.l.bf16 %v113
  %v130 = vunpack.c.l.bf16 %v114
  %v131 = vunpack.c.l.bf16 %v115
  %v132 = vunpack.c.l.bf16 %v116
  %v133 = vunpack.c.l.bf16 %v117
  %v134 = vunpack.c.l.bf16 %v118
  %v135 = vunpack.c.l.bf16 %v119
  %v136 = vunpack.c.l.bf16 %v120
  %v137 = vunpack.c.l.bf16 %v121
  %v138 = vunpack.c.l.bf16 %v122
  %v139 = vunpack.c.l.bf16 %v123
  %v140 = vunpack.c.l.bf16 %v124
  %v141 = vunpack.c.l.bf16 %v125
  %v142 = vunpack.c.l.bf16 %v126
  %v143 = vunpack.c.l.bf16 %v127
  %v144 = vunpack.c.l.bf16 %v128
  %v145 = vadd.f32 %v97, %v129
  %v146 = vadd.f32 %v98, %v130
  %v147 = vadd.f32 %v99, %v131
  %v148 = vadd.f32 %v100, %v132
  %v149 = vadd.f32 %v101, %v133
  %v150 = vadd.f32 %v102, %v134
  %v151 = vadd.f32 %v103, %v135
  %v152 = vadd.f32 %v104, %v136
  %v153 = vadd.f32 %v105, %v137
  %v154 = vadd.f32 %v106, %v138
  %v155 = vadd.f32 %v107, %v139
  %v156 = vadd.f32 %v108, %v140
  %v157 = vadd.f32 %v109, %v141
  %v158 = vadd.f32 %v110, %v142
  %v159 = vadd.f32 %v111, %v143
  %v160 = vadd.f32 %v112, %v144
  %v161 = vmax.f32 %v145, 0.0
  %v162 = vmax.f32 %v146, 0.0
  %v163 = vmax.f32 %v147, 0.0
  %v164 = vmax.f32 %v148, 0.0
  %v165 = vmax.f32 %v149, 0.0
  %v166 = vmax.f32 %v150, 0.0
  %v167 = vmax.f32 %v151, 0.0
  %v168 = vmax.f32 %v152, 0.0
  %v169 = vmax.f32 %v153, 0.0
  %v170 = vmax.f32 %v154, 0.0
  %v171 = vmax.f32 %v155, 0.0
  %v172 = vmax.f32 %v156, 0.0
  %v173 = vmax.f32 %v157, 0.0
  %v174 = vmax.f32 %v158, 0.0
  %v175 = vmax.f32 %v159, 0.0
  %v176 = vmax.f32 %v160, 0.0
  %177 = vst [vmem:[%s5] sm:$0xff] %v161
  %178 = vst [vmem:[%s5 + $0x8] sm:$0xff] %v162
  %179 = vst [vmem:[%s5 + $0x10] sm:$0xff] %v163
  %180 = vst [vmem:[%s5 + $0x18] sm:$0xff] %v164
  %181 = vst [vmem:[%s5 + $0x20] sm:$0xff] %v165
  %182 = vst [vmem:[%s5 + $0x28] sm:$0xff] %v166
  %183 = vst [vmem:[%s5 + $0x30] sm:$0xff] %v167
  %184 = vst [vmem:[%s5 + $0x38] sm:$0xff] %v168
  %185 = vst [vmem:[%s5 + $0x40] sm:$0xff] %v169
  %186 = vst [vmem:[%s5 + $0x48] sm:$0xff] %v170
  %187 = vst [vmem:[%s5 + $0x50] sm:$0xff] %v171
  %188 = vst [vmem:[%s5 + $0x58] sm:$0xff] %v172
  %189 = vst [vmem:[%s5 + $0x60] sm:$0xff] %v173
  %190 = vst [vmem:[%s5 + $0x68] sm:$0xff] %v174
  %191 = vst [vmem:[%s5 + $0x70] sm:$0xff] %v175
  %192 = vst [vmem:[%s5 + $0x78] sm:$0xff] %v176
  // Predicated region
  $region22: #{basic_block_geo_forward.7} parent=0 // pred_check
    _
  $region23: #{basic_block_geo_forward.7} parent=0 // pred_check_branch
    %194 = sbr.rel (0) target = $region25
  $region24: #{basic_block_geo_forward.7} parent=0 // pred_region
    _
  $region25: #{basic_block_geo_forward.7} parent=0 // pred_fallthru
    _
  // Predicated region
  $region26: #{basic_block_geo_forward.7} parent=0 // pred_check
    _
  $region27: #{basic_block_geo_forward.7} parent=0 // pred_check_branch
    %196 = sbr.rel (0) target = $region29
  $region28: #{basic_block_geo_forward.7} parent=0 // pred_region
    _
  $region29: #{basic_block_geo_forward.7} parent=0 // pred_fallthru
    _

</llo_original>
